<compile_context>
chip_gen: v7x
topology: tpu7x:2x2x1
jax: 0.10.0
libtpu: 0.0.40
codegen_flags: <defaults>
</compile_context>

<pallas_src>
import jax
import jax.numpy as jnp
from jax.experimental import pallas as pl
from jax.experimental.pallas import tpu as pltpu

EPS = 1e-5  # nn.LayerNorm default


def _round_up(v, m):
    return ((v + m - 1) // m) * m


def _make_kernel(d_real):
    """Kernel factory; d_real is the true (unpadded) embed dim."""
    inv_d = 1.0 / float(d_real)

    def kernel(x_ref, w_ref, b_ref, o_ref):
        x = x_ref[...].astype(jnp.float32)                 # (TB, Dp) f32
        d_pad = x.shape[-1]

        # ---- LayerNorm statistics (two-pass, f32) ----
        mean = jnp.sum(x, axis=-1, keepdims=True) * inv_d  # padded cols are 0
        centered = x - mean
        if d_pad != d_real:
            lane = jax.lax.broadcasted_iota(jnp.int32, x.shape, 1)
            centered = jnp.where(lane < d_real, centered, 0.0)
        var = jnp.sum(centered * centered, axis=-1, keepdims=True) * inv_d
        inv = jax.lax.rsqrt(var + EPS)                     # EUP, ~free
        xn = centered * inv                                # padded cols stay 0

        # ---- Head: (TB, Dp) @ (Dp, Cp) + b'  (f32 MXU accumulation) ----
        y = jnp.dot(xn.astype(w_ref.dtype), w_ref[...],
                    preferred_element_type=jnp.float32)
        o_ref[...] = (y + b_ref[...]).astype(o_ref.dtype)

    return kernel


def prepare_classifier_params(gamma, beta, w_t, b, weight_dtype=None):
    """One-time prep (hoist/cache this): fold LN affine into the head and pad.

    gamma/beta: (D,); w_t: (D, C) [= head.weight.T]; b: (C,).
    Returns (w_fold_padded, b_fold_padded, D, C).
    """
    D, C = w_t.shape
    w_f32 = w_t.astype(jnp.float32)
    w_fold = gamma.astype(jnp.float32)[:, None] * w_f32                # (D, C)
    b_fold = beta.astype(jnp.float32) @ w_f32 + b.astype(jnp.float32)  # (C,)

    wd = weight_dtype if weight_dtype is not None else w_t.dtype
    w_fold = w_fold.astype(wd)

    D_pad = max(128, _round_up(D, 128))
    C_pad = max(128, _round_up(C, 128))
    if D_pad != D or C_pad != C:
        w_fold = jnp.pad(w_fold, ((0, D_pad - D), (0, C_pad - C)))
    if C_pad != C:
        b_fold = jnp.pad(b_fold, ((0, C_pad - C),))
    b2 = b_fold.reshape(1, C_pad).astype(jnp.float32)
    return w_fold, b2, D, C


def continual_classifier_apply(x, w_fold, b2, d_real, c_real):
    """x: (B, D); w_fold: (Dp, Cp) folded+padded head; b2: (1, Cp) f32."""
    B, D = x.shape
    D_pad, C_pad = w_fold.shape
    out_dtype = x.dtype

    # ---- Pad embed dim of x to the lane-dense padded width ----
    if D_pad != D:
        x = jnp.pad(x, ((0, 0), (0, D_pad - D)))

    itemsize_x = jnp.dtype(x.dtype).itemsize
    itemsize_w = jnp.dtype(w_fold.dtype).itemsize
    sub = 16 if itemsize_x < 4 else 8

    # ---- Batch tile selection: budget includes f32 temporaries + pipelining ----
    budget = 20 * 1024 * 1024                          # plan <= 20 MiB of VMEM
    vmem_limit = 32 * 1024 * 1024                      # tell Mosaic the same story
    resident = D_pad * C_pad * itemsize_w + C_pad * 4  # single-buffered W' + b'
    per_row = (2 * D_pad * itemsize_x                  # double-buffered x tile
               + 2 * C_pad * itemsize_x                # double-buffered out tile
               + (2 * D_pad + C_pad) * 4               # f32 x/centered + accumulator
               + D_pad * itemsize_w)                   # xn cast to weight dtype
    tb_cap = max(sub, (budget - resident) // max(per_row, 1))

    TB = min(tb_cap, _round_up(B, sub))
    # Align TB to the MXU M tile when possible (256 on v6e/v7x, 128 on v5e).
    if TB >= 256:
        TB = (TB // 256) * 256
    elif TB >= 128:
        TB = (TB // 128) * 128
    else:
        TB = max(sub, (TB // sub) * sub)
    # v7x: make sure there are >= 2 grid steps so both TensorCores get work.
    if TB >= B and B >= 2 * sub:
        TB = _round_up(-(-B // 2), sub)

    B_pad = _round_up(B, TB)
    x_p = jnp.pad(x, ((0, B_pad - B), (0, 0))) if B_pad != B else x
    grid = (B_pad // TB,)

    cost = pl.CostEstimate(
        flops=2 * B_pad * D_pad * C_pad + 10 * B_pad * D_pad,
        transcendentals=B_pad,
        bytes_accessed=(B_pad * D_pad * itemsize_x + D_pad * C_pad * itemsize_w
                        + C_pad * 4 + B_pad * C_pad * itemsize_x),
    )

    out = pl.pallas_call(
        _make_kernel(d_real),
        out_shape=jax.ShapeDtypeStruct((B_pad, C_pad), out_dtype),
        grid_spec=pl.GridSpec(
            grid=grid,
            in_specs=[
                pl.BlockSpec((TB, D_pad), lambda i: (i, 0)),           # x tile, pipelined
                pl.BlockSpec((D_pad, C_pad), lambda i: (0, 0),
                             pipeline_mode=pl.Buffered(1)),            # W' resident, 1 buf
                pl.BlockSpec((1, C_pad), lambda i: (0, 0),
                             pipeline_mode=pl.Buffered(1)),            # b' resident, 1 buf
            ],
            out_specs=pl.BlockSpec((TB, C_pad), lambda i: (i, 0)),
        ),
        compiler_params=pltpu.CompilerParams(
            dimension_semantics=("parallel",),
            vmem_limit_bytes=vmem_limit),
        cost_estimate=cost,
    )(x_p, w_fold, b2)

    return out[:B, :c_real]


def continual_classifier_forward(x, gamma, beta, w_t, b):
    """Convenience one-shot path. For repeated inference, call
    prepare_classifier_params once and reuse its outputs with
    continual_classifier_apply."""
    w_fold, b2, d_real, c_real = prepare_classifier_params(gamma, beta, w_t, b)
    return continual_classifier_apply(x, w_fold, b2, d_real, c_real)


def _reference(x, gamma, beta, w_t, b):
    xf = x.astype(jnp.float32)
    mean = jnp.mean(xf, axis=-1, keepdims=True)
    var = jnp.mean((xf - mean) ** 2, axis=-1, keepdims=True)
    xn = (xf - mean) / jnp.sqrt(var + EPS)
    xn = xn * gamma + beta
    return xn @ w_t.astype(jnp.float32) + b


if __name__ == "__main__":
    embed_dim = 32
    nb_classes = 16
    batch = 8

    key = jax.random.PRNGKey(0)
    kx, kw, kb, kg, kbe = jax.random.split(key, 5)

    # Deterministic synthetic parameters (shapes per nn.Linear / nn.LayerNorm).
    x = jax.random.normal(kx, (batch, embed_dim), dtype=jnp.float32)
    # Non-trivial gamma/beta to exercise the affine fold.
    gamma = 1.0 + 0.1 * jax.random.normal(kg, (embed_dim,), dtype=jnp.float32)
    beta = 0.1 * jax.random.normal(kbe, (embed_dim,), dtype=jnp.float32)
    # Linear: weight (nb_classes, embed_dim) ~ U(-1/sqrt(D), 1/sqrt(D)); stored transposed.
    bound = 1.0 / (embed_dim ** 0.5)
    w = jax.random.uniform(kw, (nb_classes, embed_dim),
                           minval=-bound, maxval=bound, dtype=jnp.float32)
    b = jax.random.uniform(kb, (nb_classes,),
                           minval=-bound, maxval=bound, dtype=jnp.float32)
    w_t = w.T  # (embed_dim, nb_classes)

    # Prep once (cacheable), apply once.
    w_fold, b2, d_real, c_real = prepare_classifier_params(gamma, beta, w_t, b)
    out = continual_classifier_apply(x, w_fold, b2, d_real, c_real)
    out = jax.block_until_ready(out)

    ref = _reference(x, gamma, beta, w_t, b)
    assert out.shape == (batch, nb_classes)
    assert jnp.allclose(out, ref, atol=1e-4, rtol=1e-4), "mismatch vs reference"

    print("KERNEL_OK")
</pallas_src>

<mosaic_0001>
module attributes {stable_mosaic.version = 11 : i64} {
  func.func @kernel(%arg0: i32, %arg1: memref<8x128xf32, #tpu.memory_space<vmem>>, %arg2: memref<128x128xf32, #tpu.memory_space<vmem>>, %arg3: memref<1x128xf32, #tpu.memory_space<vmem>>, %arg4: memref<8x128xf32, #tpu.memory_space<vmem>>) attributes {dimension_semantics = [#tpu.dimension_semantics<parallel>], iteration_bounds = array<i64: 1>, scalar_prefetch = 0 : i64, scratch_operands = 0 : i64, tpu.core_type = #tpu.core_type<tc>, window_params = [{transform_indices = @transform_0, window_bounds = array<i64: 8, 128>}, {pipeline_mode = #tpu.pipeline_mode<synchronous>, transform_indices = @transform_1, window_bounds = array<i64: 128, 128>}, {pipeline_mode = #tpu.pipeline_mode<synchronous>, transform_indices = @transform_2, window_bounds = array<i64: 1, 128>}, {transform_indices = @transform_3, window_bounds = array<i64: 8, 128>}]} {
    %c0 = arith.constant 0 : index
    %c0_0 = arith.constant 0 : index
    %0 = vector.load %arg1[%c0, %c0_0] : memref<8x128xf32, #tpu.memory_space<vmem>>, vector<8x128xf32>
    %cst = arith.constant dense<0.000000e+00> : vector<8xf32>
    %1 = vector.multi_reduction <add>, %0, %cst [1] : vector<8x128xf32> to vector<8xf32>
    %2 = vector.shape_cast %1 : vector<8xf32> to vector<8x1xf32>
    %cst_1 = arith.constant 3.125000e-02 : f32
    %3 = vector.broadcast %cst_1 : f32 to vector<8x1xf32>
    %4 = arith.mulf %2, %3 : vector<8x1xf32>
    %5 = vector.broadcast %4 : vector<8x1xf32> to vector<8x128xf32>
    %6 = arith.subf %0, %5 : vector<8x128xf32>
    %7 = tpu.iota {dimensions = array<i32: 1>} : vector<8x128xi32>
    %c32_i32 = arith.constant 32 : i32
    %8 = vector.broadcast %c32_i32 : i32 to vector<8x128xi32>
    %9 = arith.cmpi slt, %7, %8 : vector<8x128xi32>
    %cst_2 = arith.constant 0.000000e+00 : f32
    %10 = vector.broadcast %cst_2 : f32 to vector<8x128xf32>
    %11 = arith.select %9, %6, %10 : vector<8x128xi1>, vector<8x128xf32>
    %12 = arith.mulf %11, %11 : vector<8x128xf32>
    %cst_3 = arith.constant dense<0.000000e+00> : vector<8xf32>
    %13 = vector.multi_reduction <add>, %12, %cst_3 [1] : vector<8x128xf32> to vector<8xf32>
    %14 = vector.shape_cast %13 : vector<8xf32> to vector<8x1xf32>
    %cst_4 = arith.constant 3.125000e-02 : f32
    %15 = vector.broadcast %cst_4 : f32 to vector<8x1xf32>
    %16 = arith.mulf %14, %15 : vector<8x1xf32>
    %cst_5 = arith.constant 9.99999974E-6 : f32
    %17 = vector.broadcast %cst_5 : f32 to vector<8x1xf32>
    %18 = arith.addf %16, %17 : vector<8x1xf32>
    %19 = math.rsqrt %18 : vector<8x1xf32>
    %20 = vector.broadcast %19 : vector<8x1xf32> to vector<8x128xf32>
    %21 = arith.mulf %11, %20 : vector<8x128xf32>
    %c0_6 = arith.constant 0 : index
    %c0_7 = arith.constant 0 : index
    %22 = vector.load %arg2[%c0_6, %c0_7] : memref<128x128xf32, #tpu.memory_space<vmem>>, vector<128x128xf32>
    %cst_8 = arith.constant dense<0.000000e+00> : vector<8x128xf32>
    %23 = tpu.matmul %21, %22, %cst_8 {dimension_numbers = #tpu.dot_dimension_numbers<[1], [0], [0], [1], [0, 0, 1, 1], [], []>} : vector<8x128xf32>, vector<128x128xf32>, vector<8x128xf32> -> vector<8x128xf32>
    %c0_9 = arith.constant 0 : index
    %c0_10 = arith.constant 0 : index
    %24 = vector.load %arg3[%c0_9, %c0_10] : memref<1x128xf32, #tpu.memory_space<vmem>>, vector<1x128xf32>
    %25 = vector.broadcast %24 : vector<1x128xf32> to vector<8x128xf32>
    %26 = arith.addf %23, %25 : vector<8x128xf32>
    %c0_11 = arith.constant 0 : index
    %c0_12 = arith.constant 0 : index
    %27 = vector.load %arg4[%c0_11, %c0_12] : memref<8x128xf32, #tpu.memory_space<vmem>>, vector<8x128xf32>
    tpu.vector_store %arg4[%c0_11, %c0_12], %26 {strides = array<i32>} : memref<8x128xf32, #tpu.memory_space<vmem>>, vector<8x128xf32>,
    return
  }
  func.func @transform_0(%arg0: i32) -> (i32, i32) {
    %c0_i32 = arith.constant 0 : i32
    %c0_i32_0 = arith.constant 0 : i32
    return %arg0, %c0_i32 : i32, i32
  }
  func.func @transform_1(%arg0: i32) -> (i32, i32) {
    %c0_i32 = arith.constant 0 : i32
    %c0_i32_0 = arith.constant 0 : i32
    %c0_i32_1 = arith.constant 0 : i32
    return %c0_i32, %c0_i32_0 : i32, i32
  }
  func.func @transform_2(%arg0: i32) -> (i32, i32) {
    %c0_i32 = arith.constant 0 : i32
    %c0_i32_0 = arith.constant 0 : i32
    %c0_i32_1 = arith.constant 0 : i32
    return %c0_i32, %c0_i32_0 : i32, i32
  }
  func.func @transform_3(%arg0: i32) -> (i32, i32) {
    %c0_i32 = arith.constant 0 : i32
    %c0_i32_0 = arith.constant 0 : i32
    return %arg0, %c0_i32 : i32, i32
  }
}

</mosaic_0001>

<llo_original>
// kernel: tpu_custom_call.1
$region0: #{tpu_custom_call.1}
  #allocation0 [shape = 'u32[]', space=smem, size = 0x4, offset = 0x4, fixed_abs, tag = 'smem constant byte address 0x4 - core index']
  #allocation1 [shape = 'u32[144,128]{1,0:T(1,128)}', space=vmem, size = 0x12000, scoped, tag = 'internal scratch']
  %s0 = inlined_call_operand.hbm [shape: f32[8,128], index: 0, kind: input, shape index: {}]
  %s1 = inlined_call_operand.hbm [shape: f32[128,128], index: 1, kind: input, shape index: {}]
  %s2 = inlined_call_operand.vmem [shape: f32[1,128], index: 2, kind: input, shape index: {}]
  %s3 = inlined_call_operand.hbm [shape: f32[8,128], index: 3, kind: output, shape index: {}]
  %s4 = sld [smem:[#allocation0]]
  $region30: #{tpu_custom_call.1} parent=0
    _
  %s6 = ssub.s32 1, %s4
  %s7 = scalar_select 0, %s6, %s4
  $region1: #{tpu_custom_call.1} parent=0
    #allocation2 [shape = 'u8[4096]{0}', space=vmem, size = 0x1000, scoped, tag = 'input window, operand 0, single buffered']
    #allocation3 [shape = 's32[1]{0}', space=sflag, size = 0x4, scoped, tag = 'scoped memory for tpu_custom_call.1']
    #allocation4 [shape = 's32[1]{0}', space=sflag, size = 0x4, scoped, tag = 'scoped memory for tpu_custom_call.1']
    #allocation5 [shape = 'u8[65536]{0}', space=vmem, size = 0x10000, scoped, tag = 'input window, operand 1, single buffered']
    #allocation6 [shape = 's32[1]{0}', space=sflag, size = 0x4, scoped, tag = 'scoped memory for tpu_custom_call.1']
    #allocation7 [shape = 'u8[4096]{0}', space=vmem, size = 0x1000, scoped, tag = 'output window, operand 0, single buffered']
    %8 = vsyncpa [#allocation3], 0
    %9 = vsyncpa [#allocation6], 0
    %10 = vsyncpa [#allocation4], 0
    // Predicated region
    $region2: #{tpu_custom_call.1} parent=1 // pred_check
      _
    $region3: #{tpu_custom_call.1} parent=1 // pred_check_branch
      %12 = sbr.rel (0) target = $region5
    $region4: #{tpu_custom_call.1} parent=1 // pred_region
      %s14 = ssub.s32 128, 128
      %15 = vsyncadd [#allocation3], %s14
      %s17 = sshll.u32 [#allocation2], 4
      %s18 = int_to_ptr.vmem [resolvable:$true] %s17
      %20 = dma.hbm_to_vmem [thread:$0]  %s0, 128, %s18, [#allocation3]
    $region5: #{tpu_custom_call.1} parent=1 // pred_fallthru
      _
    // Predicated region
    $region6: #{tpu_custom_call.1} parent=1 // pred_check
      _
    $region7: #{tpu_custom_call.1} parent=1 // pred_check_branch
      %22 = sbr.rel (0) target = $region9
    $region8: #{tpu_custom_call.1} parent=1 // pred_region
      %s24 = ssub.s32 2048, 2048
      %25 = vsyncadd [#allocation6], %s24
      %s26 = sshll.u32 [#allocation5], 4
      %s27 = int_to_ptr.vmem [resolvable:$true] %s26
      %32 = dma.hbm_to_vmem [thread:$0]  %s1, 2048, %s27, [#allocation6], 128, 128, 8
    $region9: #{tpu_custom_call.1} parent=1 // pred_fallthru
      _
    // Predicated region
    $region10: #{tpu_custom_call.1} parent=1 // pred_check
      _
    $region11: #{tpu_custom_call.1} parent=1 // pred_check_branch
      %34 = sbr.rel (0) target = $region13
    $region12: #{tpu_custom_call.1} parent=1 // pred_region
      _
    $region13: #{tpu_custom_call.1} parent=1 // pred_fallthru
      _
    // Predicated region
    $region14: #{tpu_custom_call.1} parent=1 // pred_check
      _
    $region15: #{tpu_custom_call.1} parent=1 // pred_check_branch
      %36 = sbr.rel (0) target = $region17
    $region16: #{tpu_custom_call.1} parent=1 // pred_region
      %37 = dma.done [#allocation3], 128
    $region17: #{tpu_custom_call.1} parent=1 // pred_fallthru
      _
    // Predicated region
    $region18: #{tpu_custom_call.1} parent=1 // pred_check
      _
    $region19: #{tpu_custom_call.1} parent=1 // pred_check_branch
      %39 = sbr.rel (0) target = $region21
    $region20: #{tpu_custom_call.1} parent=1 // pred_region
      %40 = dma.done [#allocation6], 2048
    $region21: #{tpu_custom_call.1} parent=1 // pred_fallthru
      _
    %v41 = vld [vmem:[#allocation2] sm:$0xff]
    %42 = vadd.xlane.f32.xlu0 %v41
    %v43 = vpop.xlane.xlu0 %42
    %v44 = vmul.f32 %v43, 0.03125
    %v45 = vsub.f32 %v41, %v44
    %v46 = vlaneseq
    %v47 = vand.u32 %v46, 127
    %vm48 = vcmp.lt.s32.totalorder %v47, 32
    %v49 = vsel %vm48, %v45, 0.0
    %v50 = vmul.f32 %v49, %v49
    %51 = vadd.xlane.f32.xlu0 %v50
    %v52 = vpop.xlane.xlu0 %51
    %v53 = vmul.f32 %v52, 0.03125
    %v54 = vadd.f32 %v53, 1e-05
    %v55 = vrsqrt.pop %v54
    %v56 = vmul.f32 %v49, %v55
    %v57 = vld [vmem:[#allocation5] sm:$0xff]
    %v58 = vld [vmem:[#allocation5 + $0x8] sm:$0xff]
    %v59 = vld [vmem:[#allocation5 + $0x10] sm:$0xff]
    %v60 = vld [vmem:[#allocation5 + $0x18] sm:$0xff]
    %v61 = vld [vmem:[#allocation5 + $0x20] sm:$0xff]
    %v62 = vld [vmem:[#allocation5 + $0x28] sm:$0xff]
    %v63 = vld [vmem:[#allocation5 + $0x30] sm:$0xff]
    %v64 = vld [vmem:[#allocation5 + $0x38] sm:$0xff]
    %v65 = vld [vmem:[#allocation5 + $0x40] sm:$0xff]
    %v66 = vld [vmem:[#allocation5 + $0x48] sm:$0xff]
    %v67 = vld [vmem:[#allocation5 + $0x50] sm:$0xff]
    %v68 = vld [vmem:[#allocation5 + $0x58] sm:$0xff]
    %v69 = vld [vmem:[#allocation5 + $0x60] sm:$0xff]
    %v70 = vld [vmem:[#allocation5 + $0x68] sm:$0xff]
    %v71 = vld [vmem:[#allocation5 + $0x70] sm:$0xff]
    %v72 = vld [vmem:[#allocation5 + $0x78] sm:$0xff]
    %v73 = vld [vmem:[%s2] sm:$0x1]
    %v75 = vlaneseq
    %v76 = vshrl.u32 %v75, 7
    %v77 = vsub.s32 0, %v76
    %v78 = vrot.slane %v73, %v77
    %80 = vmatprep.subr.mxu0 0.0
    %81 = vmatpush1.msra.mxu0 %v57
    %82 = vmatprep.subr.mxu0 0.0
    %83 = vmatpush1.msra.mxu0 %v58
    %84 = vmatprep.subr.mxu0 0.0
    %85 = vmatpush1.msra.mxu0 %v59
    %86 = vmatprep.subr.mxu0 0.0
    %87 = vmatpush1.msra.mxu0 %v60
    %88 = vmatprep.subr.mxu0 0.0
    %89 = vmatpush1.msra.mxu0 %v61
    %90 = vmatprep.subr.mxu0 0.0
    %91 = vmatpush1.msra.mxu0 %v62
    %92 = vmatprep.subr.mxu0 0.0
    %93 = vmatpush1.msra.mxu0 %v63
    %94 = vmatprep.subr.mxu0 0.0
    %95 = vmatpush1.msra.mxu0 %v64
    %96 = vmatprep.subr.mxu0 0.0
    %97 = vmatpush1.msra.mxu0 %v65
    %98 = vmatprep.subr.mxu0 0.0
    %99 = vmatpush1.msra.mxu0 %v66
    %100 = vmatprep.subr.mxu0 0.0
    %101 = vmatpush1.msra.mxu0 %v67
    %102 = vmatprep.subr.mxu0 0.0
    %103 = vmatpush1.msra.mxu0 %v68
    %104 = vmatprep.subr.mxu0 0.0
    %105 = vmatpush1.msra.mxu0 %v69
    %106 = vmatprep.subr.mxu0 0.0
    %107 = vmatpush1.msra.mxu0 %v70
    %108 = vmatprep.subr.mxu0 0.0
    %109 = vmatpush1.msra.mxu0 %v71
    %110 = vmatprep.subr.mxu0 0.0
    %111 = vmatpush1.msra.mxu0 %v72
    %112 = vmatprep.subr.mxu0 0.0
    %113 = vmatpush1.msra.mxu0 0.0
    %114 = vmatprep.subr.mxu0 0.0
    %115 = vmatpush1.msra.mxu0 0.0
    %116 = vmatprep.subr.mxu0 0.0
    %117 = vmatpush1.msra.mxu0 0.0
    %118 = vmatprep.subr.mxu0 0.0
    %119 = vmatpush1.msra.mxu0 0.0
    %120 = vmatprep.subr.mxu0 0.0
    %121 = vmatpush1.msra.mxu0 0.0
    %122 = vmatprep.subr.mxu0 0.0
    %123 = vmatpush1.msra.mxu0 0.0
    %124 = vmatprep.subr.mxu0 0.0
    %125 = vmatpush1.msra.mxu0 0.0
    %126 = vmatprep.subr.mxu0 0.0
    %127 = vmatpush1.msra.mxu0 0.0
    %128 = vmatprep.subr.mxu0 0.0
    %129 = vmatpush1.msra.mxu0 0.0
    %130 = vmatprep.subr.mxu0 0.0
    %131 = vmatpush1.msra.mxu0 0.0
    %132 = vmatprep.subr.mxu0 0.0
    %133 = vmatpush1.msra.mxu0 0.0
    %134 = vmatprep.subr.mxu0 0.0
    %135 = vmatpush1.msra.mxu0 0.0
    %136 = vmatprep.subr.mxu0 0.0
    %137 = vmatpush1.msra.mxu0 0.0
    %138 = vmatprep.subr.mxu0 0.0
    %139 = vmatpush1.msra.mxu0 0.0
    %140 = vmatprep.subr.mxu0 0.0
    %141 = vmatpush1.msra.mxu0 0.0
    %142 = vmatprep.subr.mxu0 0.0
    %143 = vmatpush1.msra.mxu0 0.0
    %144 = vmatprep.mubr.f32.mxu0 0.0
    %145 = vmatmul.mubr.f32.gmra.mrb[0].mxu0 %v56
    %v146 = vpop.f32.mrb[0].mxu0
    %v147 = vadd.f32 %v78, %v146
    %v148 = vpop.f32.mrb[0].mxu0
    %149 = vdwg.mxu0
    %150 = vst [vmem:[#allocation7] sm:$0xff] %v147
    // Predicated region
    $region22: #{tpu_custom_call.1} parent=1 // pred_check
      _
    $region23: #{tpu_custom_call.1} parent=1 // pred_check_branch
      %152 = sbr.rel (0) target = $region25
    $region24: #{tpu_custom_call.1} parent=1 // pred_region
      %s154 = ssub.s32 128, 128
      %155 = vsyncadd [#allocation4], %s154
      %s157 = sshll.u32 [#allocation7], 4
      %s158 = int_to_ptr.vmem [resolvable:$true] %s157
      %160 = dma.vmem_to_hbm [thread:$0]  %s158, 128, %s3, [#allocation4]
    $region25: #{tpu_custom_call.1} parent=1 // pred_fallthru
      _
    // Predicated region
    $region26: #{tpu_custom_call.1} parent=1 // pred_check
      _
    $region27: #{tpu_custom_call.1} parent=1 // pred_check_branch
      %162 = sbr.rel (0) target = $region29
    $region28: #{tpu_custom_call.1} parent=1 // pred_region
      %163 = dma.done [#allocation4], 128
    $region29: #{tpu_custom_call.1} parent=1 // pred_fallthru
      _
    %164 = vsyncpa [#allocation3], 1
    %165 = vsyncpa [#allocation6], 1
    %166 = vsyncpa [#allocation4], 1

</llo_original>
